<compile_context>
chip_gen: v6e
topology: v6e:2x2x1
jax: 0.10.0
libtpu: 0.0.40
codegen_flags: <defaults>
</compile_context>

<pallas_src>
import functools

import numpy as np

import jax
import jax.numpy as jnp
from jax import lax
from jax.experimental import pallas as pl
from jax.experimental.pallas import tpu as pltpu


def _round_up(x, m):
    return (x + m - 1) // m * m


@functools.lru_cache(maxsize=8)
def _dft_basis(T, n_pad, dtype_name):
    """Return (T, 2*n_pad) [cos | sin] DFT basis; columns k >= 3*T are zero."""
    n_fft = 3 * T
    n = np.arange(T, dtype=np.float64)[:, None]
    k = np.arange(n_pad, dtype=np.float64)[None, :]
    ang = 2.0 * np.pi * n * k / float(n_fft)
    valid = (np.arange(n_pad) < n_fft).astype(np.float64)[None, :]
    cos_m = np.cos(ang) * valid
    sin_m = np.sin(ang) * valid
    basis = np.concatenate([cos_m, sin_m], axis=1)
    return jnp.asarray(basis, dtype=jnp.dtype(dtype_name))


def _np_nsnr_kernel(r_ref, g_ref, fs_ref, basis_ref, out_ref, sig_ref, *,
                    tile_b, n_fft, Lambda, LowF, upF, width, norm_k):
    TB = tile_b
    T = r_ref.shape[-1]
    n_pad = basis_ref.shape[-1] // 2

    r = r_ref[...]                                       # (TB, T)
    g = g_ref[...]                                       # (TB, T)

    # ---- Pearson correlation per batch row (VPU + XLU reductions, EUP rsqrt) ----
    Tn = jnp.float32(T)
    sum_x = jnp.sum(r, axis=-1, keepdims=True)
    sum_y = jnp.sum(g, axis=-1, keepdims=True)
    sum_xy = jnp.sum(r * g, axis=-1, keepdims=True)
    sum_x2 = jnp.sum(r * r, axis=-1, keepdims=True)
    sum_y2 = jnp.sum(g * g, axis=-1, keepdims=True)
    denom = (Tn * sum_x2 - sum_x * sum_x) * (Tn * sum_y2 - sum_y * sum_y)
    pearson = (Tn * sum_xy - sum_x * sum_y) * lax.rsqrt(denom)   # (TB, 1)

    # ---- |FFT|^2 via one dense-DFT MXU contraction (M = 2*TB) ----
    sig_ref[:TB, :] = r.astype(sig_ref.dtype)            # stack rppg / gt rows
    sig_ref[TB:, :] = g.astype(sig_ref.dtype)            # in VMEM scratch
    res = jnp.dot(sig_ref[...], basis_ref[...],
                  preferred_element_type=jnp.float32)    # (2*TB, 2*n_pad)
    re = res[:, :n_pad]
    im = res[:, n_pad:]
    spec = re * re + im * im                             # (2*TB, n_pad)
    fft = spec[:TB, :]
    gt_fft = spec[TB:, :]

    # ---- band-pass masking with per-row Fs ----
    fs = fs_ref[...]                                     # (TB, 1)
    k = lax.broadcasted_iota(jnp.int32, (TB, n_pad), 1).astype(jnp.float32)
    freq = k * fs * jnp.float32(1.0 / n_fft)             # (TB, n_pad)
    out_of_band = jnp.logical_or(freq > upF, freq < LowF)
    fft = jnp.where(out_of_band, 0.0, fft)
    gt_fft = jnp.where(out_of_band, 0.0, gt_fft)

    # Peak frequency of the band-limited ground-truth spectrum.  freq is
    # monotonically increasing, so min(freq where gt_fft == max) reproduces
    # torch.argmax's "first maximum" semantics.
    mx = jnp.max(gt_fft, axis=-1, keepdims=True)
    peak = jnp.min(jnp.where(gt_fft == mx, freq, jnp.float32(1e30)),
                   axis=-1, keepdims=True)               # (TB, 1)

    half_w = jnp.float32(width / 2.0)
    m1 = jnp.logical_and(freq < peak + half_w, peak - half_w < freq)
    m2 = jnp.logical_and(freq < 2.0 * peak + half_w, 2.0 * peak - half_w < freq)
    mask = jnp.logical_or(m1, m2)

    power = jnp.sum(jnp.where(mask, fft, 0.0), axis=-1, keepdims=True)
    noise = jnp.sum(jnp.where(mask, 0.0, fft), axis=-1, keepdims=True)
    snr = 10.0 * jnp.log10(power / noise) * jnp.float32(norm_k)

    loss_row = 1.0 - (pearson + jnp.float32(Lambda) * snr)       # (TB, 1)

    # Lane-dense, unmasked store: replicate the per-row loss across all 128
    # lanes; the wrapper reads lane 0.
    out_ref[...] = jnp.broadcast_to(loss_row, (TB, 128))


def np_nsnr_loss(rppg, gt, time, *, Lambda, LowF=0.7, upF=3.5, width=0.4,
                 tile_b=None, matmul_dtype=jnp.float32):
    """rppg, gt, time: (B, T) float32. Returns scalar loss (float32).

    `matmul_dtype=jnp.bfloat16` casts only the MXU operands (basis + stacked
    signals) to bf16 on v6e/v7x; all reductions / epilogue math stay f32.
    """
    B, T = rppg.shape
    n_fft = 3 * T
    n_pad = _round_up(n_fft, 128)

    if tile_b is None:
        # M = 2*tile_b rows per MXU contraction (multiple of 256 when B >= 128).
        tile_b = min(128, _round_up(B, 8))
    B_pad = _round_up(B, tile_b)
    num_tiles = B_pad // tile_b

    mm_dtype = jnp.dtype(matmul_dtype)
    basis = _dft_basis(T, n_pad, mm_dtype.name)          # (T, 2*n_pad)

    rppg = rppg.astype(jnp.float32)
    gt = gt.astype(jnp.float32)
    time = time.astype(jnp.float32)

    # Fs = 1 / mean(diff(time)) = (T-1) / (t[-1] - t[0]); per batch row.
    fs = jnp.float32(T - 1) / (time[:, -1] - time[:, 0])          # (B,)

    pad_b = B_pad - B
    if pad_b:
        rppg = jnp.pad(rppg, ((0, pad_b), (0, 0)))
        gt = jnp.pad(gt, ((0, pad_b), (0, 0)))
        fs = jnp.pad(fs, (0, pad_b), constant_values=1.0)
    fs = fs.reshape(B_pad, 1)

    kernel = functools.partial(
        _np_nsnr_kernel, tile_b=tile_b, n_fft=n_fft, Lambda=float(Lambda),
        LowF=float(LowF), upF=float(upF), width=float(width), norm_k=1.0 / 10.9)

    # VMEM budget: double-buffered basis + signal blocks, scratch, and the big
    # f32 (2*TB, 2*n_pad) DFT result / spectrum intermediates, plus margin.
    basis_bytes = T * 2 * n_pad * mm_dtype.itemsize
    sig_block_bytes = tile_b * T * 4
    scratch_bytes = 2 * tile_b * T * mm_dtype.itemsize
    res_bytes = 2 * tile_b * 2 * n_pad * 4
    vmem_limit = int(min(
        max(32 << 20,
            2 * basis_bytes + 4 * sig_block_bytes + scratch_bytes
            + 3 * res_bytes + (8 << 20)),
        112 << 20))

    out = pl.pallas_call(
        kernel,
        out_shape=jax.ShapeDtypeStruct((B_pad, 128), jnp.float32),
        grid_spec=pltpu.PrefetchScalarGridSpec(
            num_scalar_prefetch=0,
            grid=(num_tiles,),
            in_specs=[
                pl.BlockSpec((tile_b, T), lambda i: (i, 0)),       # rppg tile
                pl.BlockSpec((tile_b, T), lambda i: (i, 0)),       # gt tile
                pl.BlockSpec((tile_b, 1), lambda i: (i, 0)),       # per-row Fs
                pl.BlockSpec((T, 2 * n_pad), lambda i: (0, 0)),    # DFT basis (const)
            ],
            out_specs=pl.BlockSpec((tile_b, 128), lambda i: (i, 0)),
            scratch_shapes=[pltpu.VMEM((2 * tile_b, T), mm_dtype)],
        ),
        compiler_params=pltpu.CompilerParams(
            dimension_semantics=("parallel",),
            vmem_limit_bytes=vmem_limit),
    )(rppg, gt, fs, basis)

    return jnp.mean(out[:B, 0])


if __name__ == "__main__":
    key = jax.random.PRNGKey(0)
    B, T = 2, 128
    k1, k2 = jax.random.split(key)
    rppg = jax.random.normal(k1, (B, T), dtype=jnp.float32)
    gt = jax.random.normal(k2, (B, T), dtype=jnp.float32)
    # ~30 Hz sampling timestamps (monotonic), per batch element.
    time = jnp.broadcast_to(jnp.arange(T, dtype=jnp.float32) / 30.0, (B, T))

    loss = np_nsnr_loss(rppg, gt, time, Lambda=0.5)
    jax.block_until_ready(loss)
    print("KERNEL_OK")
</pallas_src>

<mosaic_0001>
module attributes {stable_mosaic.version = 11 : i64} {
  func.func @_np_nsnr_kernel(%arg0: i32, %arg1: memref<8x128xf32, #tpu.memory_space<vmem>>, %arg2: memref<8x128xf32, #tpu.memory_space<vmem>>, %arg3: memref<8x1xf32, #tpu.memory_space<vmem>>, %arg4: memref<128x768xf32, #tpu.memory_space<vmem>>, %arg5: memref<8x128xf32, #tpu.memory_space<vmem>>, %arg6: memref<16x128xf32, #tpu.memory_space<vmem>>) attributes {dimension_semantics = [#tpu.dimension_semantics<parallel>], iteration_bounds = array<i64: 1>, scalar_prefetch = 0 : i64, scratch_operands = 1 : i64, tpu.core_type = #tpu.core_type<tc>, window_params = [{transform_indices = @transform_0, window_bounds = array<i64: 8, 128>}, {transform_indices = @transform_1, window_bounds = array<i64: 8, 128>}, {transform_indices = @transform_2, window_bounds = array<i64: 8, 1>}, {pipeline_mode = #tpu.pipeline_mode<synchronous>, transform_indices = @transform_3, window_bounds = array<i64: 128, 768>}, {transform_indices = @transform_4, window_bounds = array<i64: 8, 128>}]} {
    %c0 = arith.constant 0 : index
    %c0_0 = arith.constant 0 : index
    %0 = vector.load %arg1[%c0, %c0_0] : memref<8x128xf32, #tpu.memory_space<vmem>>, vector<8x128xf32>
    %c0_1 = arith.constant 0 : index
    %c0_2 = arith.constant 0 : index
    %1 = vector.load %arg2[%c0_1, %c0_2] : memref<8x128xf32, #tpu.memory_space<vmem>>, vector<8x128xf32>
    %cst = arith.constant dense<0.000000e+00> : vector<8xf32>
    %2 = vector.multi_reduction <add>, %0, %cst [1] : vector<8x128xf32> to vector<8xf32>
    %3 = vector.shape_cast %2 : vector<8xf32> to vector<8x1xf32>
    %cst_3 = arith.constant dense<0.000000e+00> : vector<8xf32>
    %4 = vector.multi_reduction <add>, %1, %cst_3 [1] : vector<8x128xf32> to vector<8xf32>
    %5 = vector.shape_cast %4 : vector<8xf32> to vector<8x1xf32>
    %6 = arith.mulf %0, %1 : vector<8x128xf32>
    %cst_4 = arith.constant dense<0.000000e+00> : vector<8xf32>
    %7 = vector.multi_reduction <add>, %6, %cst_4 [1] : vector<8x128xf32> to vector<8xf32>
    %8 = vector.shape_cast %7 : vector<8xf32> to vector<8x1xf32>
    %9 = arith.mulf %0, %0 : vector<8x128xf32>
    %cst_5 = arith.constant dense<0.000000e+00> : vector<8xf32>
    %10 = vector.multi_reduction <add>, %9, %cst_5 [1] : vector<8x128xf32> to vector<8xf32>
    %11 = vector.shape_cast %10 : vector<8xf32> to vector<8x1xf32>
    %12 = arith.mulf %1, %1 : vector<8x128xf32>
    %cst_6 = arith.constant dense<0.000000e+00> : vector<8xf32>
    %13 = vector.multi_reduction <add>, %12, %cst_6 [1] : vector<8x128xf32> to vector<8xf32>
    %14 = vector.shape_cast %13 : vector<8xf32> to vector<8x1xf32>
    %cst_7 = arith.constant 1.280000e+02 : f32
    %15 = vector.broadcast %cst_7 : f32 to vector<8x1xf32>
    %16 = arith.mulf %15, %11 : vector<8x1xf32>
    %17 = arith.mulf %3, %3 : vector<8x1xf32>
    %18 = arith.subf %16, %17 : vector<8x1xf32>
    %cst_8 = arith.constant 1.280000e+02 : f32
    %19 = vector.broadcast %cst_8 : f32 to vector<8x1xf32>
    %20 = arith.mulf %19, %14 : vector<8x1xf32>
    %21 = arith.mulf %5, %5 : vector<8x1xf32>
    %22 = arith.subf %20, %21 : vector<8x1xf32>
    %23 = arith.mulf %18, %22 : vector<8x1xf32>
    %cst_9 = arith.constant 1.280000e+02 : f32
    %24 = vector.broadcast %cst_9 : f32 to vector<8x1xf32>
    %25 = arith.mulf %24, %8 : vector<8x1xf32>
    %26 = arith.mulf %3, %5 : vector<8x1xf32>
    %27 = arith.subf %25, %26 : vector<8x1xf32>
    %28 = math.rsqrt %23 : vector<8x1xf32>
    %29 = arith.mulf %27, %28 : vector<8x1xf32>
    %c0_10 = arith.constant 0 : index
    %c0_11 = arith.constant 0 : index
    %30 = vector.load %arg6[%c0_10, %c0_11] : memref<16x128xf32, #tpu.memory_space<vmem>>, vector<8x128xf32>
    tpu.vector_store %arg6[%c0_10, %c0_11], %0 {strides = array<i32>} : memref<16x128xf32, #tpu.memory_space<vmem>>, vector<8x128xf32>,
    %c8 = arith.constant 8 : index
    %c0_12 = arith.constant 0 : index
    %31 = vector.load %arg6[%c8, %c0_12] : memref<16x128xf32, #tpu.memory_space<vmem>>, vector<8x128xf32>
    tpu.vector_store %arg6[%c8, %c0_12], %1 {strides = array<i32>} : memref<16x128xf32, #tpu.memory_space<vmem>>, vector<8x128xf32>,
    %c0_13 = arith.constant 0 : index
    %c0_14 = arith.constant 0 : index
    %32 = vector.load %arg6[%c0_13, %c0_14] : memref<16x128xf32, #tpu.memory_space<vmem>>, vector<16x128xf32>
    %c0_15 = arith.constant 0 : index
    %c0_16 = arith.constant 0 : index
    %33 = vector.load %arg4[%c0_15, %c0_16] : memref<128x768xf32, #tpu.memory_space<vmem>>, vector<128x768xf32>
    %cst_17 = arith.constant dense<0.000000e+00> : vector<16x768xf32>
    %34 = tpu.matmul %32, %33, %cst_17 {dimension_numbers = #tpu.dot_dimension_numbers<[1], [0], [0], [1], [0, 0, 1, 1], [], []>} : vector<16x128xf32>, vector<128x768xf32>, vector<16x768xf32> -> vector<16x768xf32>
    %35 = vector.extract_strided_slice %34 {offsets = [0, 0], sizes = [16, 384], strides = [1, 1]} : vector<16x768xf32> to vector<16x384xf32>
    %36 = vector.extract_strided_slice %34 {offsets = [0, 384], sizes = [16, 384], strides = [1, 1]} : vector<16x768xf32> to vector<16x384xf32>
    %37 = arith.mulf %35, %35 : vector<16x384xf32>
    %38 = arith.mulf %36, %36 : vector<16x384xf32>
    %39 = arith.addf %37, %38 : vector<16x384xf32>
    %40 = vector.extract_strided_slice %39 {offsets = [0, 0], sizes = [8, 384], strides = [1, 1]} : vector<16x384xf32> to vector<8x384xf32>
    %41 = vector.extract_strided_slice %39 {offsets = [8, 0], sizes = [8, 384], strides = [1, 1]} : vector<16x384xf32> to vector<8x384xf32>
    %c0_18 = arith.constant 0 : index
    %c0_19 = arith.constant 0 : index
    %42 = vector.load %arg3[%c0_18, %c0_19] : memref<8x1xf32, #tpu.memory_space<vmem>>, vector<8x1xf32>
    %43 = tpu.iota {dimensions = array<i32: 1>} : vector<8x384xi32>
    %44 = arith.sitofp %43 : vector<8x384xi32> to vector<8x384xf32>
    %45 = vector.broadcast %42 : vector<8x1xf32> to vector<8x384xf32>
    %46 = arith.mulf %44, %45 : vector<8x384xf32>
    %cst_20 = arith.constant 0.00260416674 : f32
    %47 = vector.broadcast %cst_20 : f32 to vector<8x384xf32>
    %48 = arith.mulf %46, %47 : vector<8x384xf32>
    %cst_21 = arith.constant 3.500000e+00 : f32
    %49 = vector.broadcast %cst_21 : f32 to vector<8x384xf32>
    %50 = arith.cmpf ogt, %48, %49 : vector<8x384xf32>
    %cst_22 = arith.constant 0.699999988 : f32
    %51 = vector.broadcast %cst_22 : f32 to vector<8x384xf32>
    %52 = arith.cmpf olt, %48, %51 : vector<8x384xf32>
    %53 = arith.ori %50, %52 : vector<8x384xi1>
    %cst_23 = arith.constant 0.000000e+00 : f32
    %54 = vector.broadcast %cst_23 : f32 to vector<8x384xf32>
    %55 = arith.select %53, %54, %40 : vector<8x384xi1>, vector<8x384xf32>
    %cst_24 = arith.constant 0.000000e+00 : f32
    %56 = vector.broadcast %cst_24 : f32 to vector<8x384xf32>
    %57 = arith.select %53, %56, %41 : vector<8x384xi1>, vector<8x384xf32>
    %cst_25 = arith.constant dense<0xFF800000> : vector<8xf32>
    %58 = vector.multi_reduction <maximumf>, %57, %cst_25 [1] : vector<8x384xf32> to vector<8xf32>
    %59 = vector.shape_cast %58 : vector<8xf32> to vector<8x1xf32>
    %60 = vector.broadcast %59 : vector<8x1xf32> to vector<8x384xf32>
    %61 = arith.cmpf oeq, %57, %60 : vector<8x384xf32>
    %cst_26 = arith.constant 1.000000e+30 : f32
    %62 = vector.broadcast %cst_26 : f32 to vector<8x384xf32>
    %63 = arith.select %61, %48, %62 : vector<8x384xi1>, vector<8x384xf32>
    %cst_27 = arith.constant dense<0x7F800000> : vector<8xf32>
    %64 = vector.multi_reduction <minimumf>, %63, %cst_27 [1] : vector<8x384xf32> to vector<8xf32>
    %65 = vector.shape_cast %64 : vector<8xf32> to vector<8x1xf32>
    %cst_28 = arith.constant 2.000000e-01 : f32
    %66 = vector.broadcast %cst_28 : f32 to vector<8x1xf32>
    %67 = arith.addf %65, %66 : vector<8x1xf32>
    %68 = vector.broadcast %67 : vector<8x1xf32> to vector<8x384xf32>
    %69 = arith.cmpf olt, %48, %68 : vector<8x384xf32>
    %cst_29 = arith.constant 2.000000e-01 : f32
    %70 = vector.broadcast %cst_29 : f32 to vector<8x1xf32>
    %71 = arith.subf %65, %70 : vector<8x1xf32>
    %72 = vector.broadcast %71 : vector<8x1xf32> to vector<8x384xf32>
    %73 = arith.cmpf olt, %72, %48 : vector<8x384xf32>
    %74 = arith.andi %69, %73 : vector<8x384xi1>
    %cst_30 = arith.constant 2.000000e+00 : f32
    %75 = vector.broadcast %cst_30 : f32 to vector<8x1xf32>
    %76 = arith.mulf %75, %65 : vector<8x1xf32>
    %cst_31 = arith.constant 2.000000e-01 : f32
    %77 = vector.broadcast %cst_31 : f32 to vector<8x1xf32>
    %78 = arith.addf %76, %77 : vector<8x1xf32>
    %79 = vector.broadcast %78 : vector<8x1xf32> to vector<8x384xf32>
    %80 = arith.cmpf olt, %48, %79 : vector<8x384xf32>
    %cst_32 = arith.constant 2.000000e+00 : f32
    %81 = vector.broadcast %cst_32 : f32 to vector<8x1xf32>
    %82 = arith.mulf %81, %65 : vector<8x1xf32>
    %cst_33 = arith.constant 2.000000e-01 : f32
    %83 = vector.broadcast %cst_33 : f32 to vector<8x1xf32>
    %84 = arith.subf %82, %83 : vector<8x1xf32>
    %85 = vector.broadcast %84 : vector<8x1xf32> to vector<8x384xf32>
    %86 = arith.cmpf olt, %85, %48 : vector<8x384xf32>
    %87 = arith.andi %80, %86 : vector<8x384xi1>
    %88 = arith.ori %74, %87 : vector<8x384xi1>
    %cst_34 = arith.constant 0.000000e+00 : f32
    %89 = vector.broadcast %cst_34 : f32 to vector<8x384xf32>
    %90 = arith.select %88, %55, %89 : vector<8x384xi1>, vector<8x384xf32>
    %cst_35 = arith.constant dense<0.000000e+00> : vector<8xf32>
    %91 = vector.multi_reduction <add>, %90, %cst_35 [1] : vector<8x384xf32> to vector<8xf32>
    %92 = vector.shape_cast %91 : vector<8xf32> to vector<8x1xf32>
    %cst_36 = arith.constant 0.000000e+00 : f32
    %93 = vector.broadcast %cst_36 : f32 to vector<8x384xf32>
    %94 = arith.select %88, %93, %55 : vector<8x384xi1>, vector<8x384xf32>
    %cst_37 = arith.constant dense<0.000000e+00> : vector<8xf32>
    %95 = vector.multi_reduction <add>, %94, %cst_37 [1] : vector<8x384xf32> to vector<8xf32>
    %96 = vector.shape_cast %95 : vector<8xf32> to vector<8x1xf32>
    %97 = arith.divf %92, %96 : vector<8x1xf32>
    %98 = math.log %97 : vector<8x1xf32>
    %cst_38 = arith.constant 0.434294492 : f32
    %99 = vector.broadcast %cst_38 : f32 to vector<8x1xf32>
    %100 = arith.mulf %98, %99 : vector<8x1xf32>
    %cst_39 = arith.constant 1.000000e+01 : f32
    %101 = vector.broadcast %cst_39 : f32 to vector<8x1xf32>
    %102 = arith.mulf %101, %100 : vector<8x1xf32>
    %cst_40 = arith.constant 0.091743119 : f32
    %103 = vector.broadcast %cst_40 : f32 to vector<8x1xf32>
    %104 = arith.mulf %102, %103 : vector<8x1xf32>
    %cst_41 = arith.constant 5.000000e-01 : f32
    %105 = vector.broadcast %cst_41 : f32 to vector<8x1xf32>
    %106 = arith.mulf %105, %104 : vector<8x1xf32>
    %107 = arith.addf %29, %106 : vector<8x1xf32>
    %cst_42 = arith.constant 1.000000e+00 : f32
    %108 = vector.broadcast %cst_42 : f32 to vector<8x1xf32>
    %109 = arith.subf %108, %107 : vector<8x1xf32>
    %110 = vector.shape_cast %109 : vector<8x1xf32> to vector<8x1xf32>
    %111 = vector.broadcast %110 : vector<8x1xf32> to vector<8x128xf32>
    %c0_43 = arith.constant 0 : index
    %c0_44 = arith.constant 0 : index
    %112 = vector.load %arg5[%c0_43, %c0_44] : memref<8x128xf32, #tpu.memory_space<vmem>>, vector<8x128xf32>
    tpu.vector_store %arg5[%c0_43, %c0_44], %111 {strides = array<i32>} : memref<8x128xf32, #tpu.memory_space<vmem>>, vector<8x128xf32>,
    return
  }
  func.func @transform_0(%arg0: i32) -> (i32, i32) {
    %c0_i32 = arith.constant 0 : i32
    %c0_i32_0 = arith.constant 0 : i32
    return %arg0, %c0_i32 : i32, i32
  }
  func.func @transform_1(%arg0: i32) -> (i32, i32) {
    %c0_i32 = arith.constant 0 : i32
    %c0_i32_0 = arith.constant 0 : i32
    return %arg0, %c0_i32 : i32, i32
  }
  func.func @transform_2(%arg0: i32) -> (i32, i32) {
    %c0_i32 = arith.constant 0 : i32
    %c0_i32_0 = arith.constant 0 : i32
    return %arg0, %c0_i32 : i32, i32
  }
  func.func @transform_3(%arg0: i32) -> (i32, i32) {
    %c0_i32 = arith.constant 0 : i32
    %c0_i32_0 = arith.constant 0 : i32
    %c0_i32_1 = arith.constant 0 : i32
    return %c0_i32, %c0_i32_0 : i32, i32
  }
  func.func @transform_4(%arg0: i32) -> (i32, i32) {
    %c0_i32 = arith.constant 0 : i32
    %c0_i32_0 = arith.constant 0 : i32
    return %arg0, %c0_i32 : i32, i32
  }
}

</mosaic_0001>

<llo_original>
// kernel: tpu_custom_call.1
$region0: #{tpu_custom_call.1}
  #allocation0 [shape = 'u32[]', space=smem, size = 0x4, offset = 0x4, fixed_abs, tag = 'smem constant byte address 0x4 - core index']
  #allocation1 [shape = 'u32[144,128]{1,0:T(1,128)}', space=vmem, size = 0x12000, scoped, tag = 'internal scratch']
  #allocation2 [shape = 'f32[16,128]{1,0:T(8,128)}', space=vmem, size = 0x2000, scoped, tag = 'scratch operand']
  %s0 = inlined_call_operand.vmem [shape: f32[8,128], index: 0, kind: input, shape index: {}]
  %s1 = inlined_call_operand.hbm [shape: f32[8,128], index: 1, kind: input, shape index: {}]
  %s2 = inlined_call_operand.vmem [shape: f32[8,1], index: 2, kind: input, shape index: {}]
  %s3 = inlined_call_operand.hbm [shape: f32[128,768], index: 3, kind: input, shape index: {}]
  %s4 = inlined_call_operand.hbm [shape: f32[8,128], index: 4, kind: output, shape index: {}]
  %s5 = sld [smem:[#allocation0]]
  $region34: #{tpu_custom_call.1} parent=0
    _
  %s7 = ssub.s32 1, %s5
  %s8 = scalar_select 0, %s7, %s5
  $region1: #{tpu_custom_call.1} parent=0
    #allocation3 [shape = 'u8[4096]{0}', space=vmem, size = 0x1000, scoped, tag = 'input window, operand 1, single buffered']
    #allocation4 [shape = 's32[1]{0}', space=sflag, size = 0x4, scoped, tag = 'scoped memory for tpu_custom_call.1']
    #allocation5 [shape = 's32[1]{0}', space=sflag, size = 0x4, scoped, tag = 'scoped memory for tpu_custom_call.1']
    #allocation6 [shape = 'u8[393216]{0}', space=vmem, size = 0x60000, scoped, tag = 'input window, operand 3, single buffered']
    #allocation7 [shape = 's32[1]{0}', space=sflag, size = 0x4, scoped, tag = 'scoped memory for tpu_custom_call.1']
    #allocation8 [shape = 'u8[4096]{0}', space=vmem, size = 0x1000, scoped, tag = 'output window, operand 0, single buffered']
    %9 = vsyncpa [#allocation4], 0
    %10 = vsyncpa [#allocation7], 0
    %11 = vsyncpa [#allocation5], 0
    // Predicated region
    $region2: #{tpu_custom_call.1} parent=1 // pred_check
      _
    $region3: #{tpu_custom_call.1} parent=1 // pred_check_branch
      %13 = sbr.rel (0) target = $region5
    $region4: #{tpu_custom_call.1} parent=1 // pred_region
      _
    $region5: #{tpu_custom_call.1} parent=1 // pred_fallthru
      _
    // Predicated region
    $region6: #{tpu_custom_call.1} parent=1 // pred_check
      _
    $region7: #{tpu_custom_call.1} parent=1 // pred_check_branch
      %15 = sbr.rel (0) target = $region9
    $region8: #{tpu_custom_call.1} parent=1 // pred_region
      %s17 = ssub.s32 128, 128
      %18 = vsyncadd [#allocation4], %s17
      %s20 = sshll.u32 [#allocation3], 4
      %s21 = int_to_ptr.vmem [resolvable:$true] %s20
      %23 = dma.hbm_to_vmem [thread:$0]  %s1, 128, %s21, [#allocation4]
    $region9: #{tpu_custom_call.1} parent=1 // pred_fallthru
      _
    // Predicated region
    $region10: #{tpu_custom_call.1} parent=1 // pred_check
      _
    $region11: #{tpu_custom_call.1} parent=1 // pred_check_branch
      %25 = sbr.rel (0) target = $region13
    $region12: #{tpu_custom_call.1} parent=1 // pred_region
      _
    $region13: #{tpu_custom_call.1} parent=1 // pred_fallthru
      _
    // Predicated region
    $region14: #{tpu_custom_call.1} parent=1 // pred_check
      _
    $region15: #{tpu_custom_call.1} parent=1 // pred_check_branch
      %27 = sbr.rel (0) target = $region17
    $region16: #{tpu_custom_call.1} parent=1 // pred_region
      %s29 = ssub.s32 12288, 12288
      %30 = vsyncadd [#allocation7], %s29
      %s31 = sshll.u32 [#allocation6], 4
      %s32 = int_to_ptr.vmem [resolvable:$true] %s31
      %37 = dma.hbm_to_vmem [thread:$0]  %s3, 12288, %s32, [#allocation7], 768, 768, 48
    $region17: #{tpu_custom_call.1} parent=1 // pred_fallthru
      _
    // Predicated region
    $region18: #{tpu_custom_call.1} parent=1 // pred_check
      _
    $region19: #{tpu_custom_call.1} parent=1 // pred_check_branch
      %39 = sbr.rel (0) target = $region21
    $region20: #{tpu_custom_call.1} parent=1 // pred_region
      %40 = dma.done [#allocation4], 128
    $region21: #{tpu_custom_call.1} parent=1 // pred_fallthru
      _
    // Predicated region
    $region22: #{tpu_custom_call.1} parent=1 // pred_check
      _
    $region23: #{tpu_custom_call.1} parent=1 // pred_check_branch
      %42 = sbr.rel (0) target = $region25
    $region24: #{tpu_custom_call.1} parent=1 // pred_region
      %43 = dma.done [#allocation7], 12288
    $region25: #{tpu_custom_call.1} parent=1 // pred_fallthru
      _
    %v44 = vld [vmem:[%s0] sm:$0xff]
    %v45 = vld [vmem:[#allocation3] sm:$0xff]
    %46 = vadd.xlane.f32.xlu0 %v44
    %v47 = vpop.xlane.xlu0 %46
    %48 = vadd.xlane.f32.xlu0 %v45
    %v49 = vpop.xlane.xlu0 %48
    %v50 = vmul.f32 %v44, %v45
    %51 = vadd.xlane.f32.xlu0 %v50
    %v52 = vpop.xlane.xlu0 %51
    %v53 = vmul.f32 %v44, %v44
    %54 = vadd.xlane.f32.xlu0 %v53
    %v55 = vpop.xlane.xlu0 %54
    %v56 = vmul.f32 %v45, %v45
    %57 = vadd.xlane.f32.xlu0 %v56
    %v58 = vpop.xlane.xlu0 %57
    %v59 = vmul.f32 %v55, 128.0
    %v60 = vmul.f32 %v47, %v47
    %v61 = vsub.f32 %v59, %v60
    %v62 = vmul.f32 %v58, 128.0
    %v63 = vmul.f32 %v49, %v49
    %v64 = vsub.f32 %v62, %v63
    %v65 = vmul.f32 %v61, %v64
    %v66 = vmul.f32 %v52, 128.0
    %v67 = vmul.f32 %v47, %v49
    %v68 = vsub.f32 %v66, %v67
    %v69 = vrsqrt.pop %v65
    %v70 = vmul.f32 %v68, %v69
    %71 = vst [vmem:[#allocation2] sm:$0xff] %v44
    %72 = vst [vmem:[#allocation2 + $0x8] sm:$0xff] %v45
    %v73 = vld [vmem:[#allocation2] sm:$0xff]
    %v74 = vld [vmem:[#allocation2 + $0x8] sm:$0xff]
    %v75 = vld [vmem:[#allocation6] sm:$0xff]
    %v76 = vld [vmem:[#allocation6 + $0x8] sm:$0xff]
    %v77 = vld [vmem:[#allocation6 + $0x10] sm:$0xff]
    %v78 = vld [vmem:[#allocation6 + $0x18] sm:$0xff]
    %v79 = vld [vmem:[#allocation6 + $0x20] sm:$0xff]
    %v80 = vld [vmem:[#allocation6 + $0x28] sm:$0xff]
    %v81 = vld [vmem:[#allocation6 + $0x30] sm:$0xff]
    %v82 = vld [vmem:[#allocation6 + $0x38] sm:$0xff]
    %v83 = vld [vmem:[#allocation6 + $0x40] sm:$0xff]
    %v84 = vld [vmem:[#allocation6 + $0x48] sm:$0xff]
    %v85 = vld [vmem:[#allocation6 + $0x50] sm:$0xff]
    %v86 = vld [vmem:[#allocation6 + $0x58] sm:$0xff]
    %v87 = vld [vmem:[#allocation6 + $0x60] sm:$0xff]
    %v88 = vld [vmem:[#allocation6 + $0x68] sm:$0xff]
    %v89 = vld [vmem:[#allocation6 + $0x70] sm:$0xff]
    %v90 = vld [vmem:[#allocation6 + $0x78] sm:$0xff]
    %v91 = vld [vmem:[#allocation6 + $0x80] sm:$0xff]
    %v92 = vld [vmem:[#allocation6 + $0x88] sm:$0xff]
    %v93 = vld [vmem:[#allocation6 + $0x90] sm:$0xff]
    %v94 = vld [vmem:[#allocation6 + $0x98] sm:$0xff]
    %v95 = vld [vmem:[#allocation6 + $0xa0] sm:$0xff]
    %v96 = vld [vmem:[#allocation6 + $0xa8] sm:$0xff]
    %v97 = vld [vmem:[#allocation6 + $0xb0] sm:$0xff]
    %v98 = vld [vmem:[#allocation6 + $0xb8] sm:$0xff]
    %v99 = vld [vmem:[#allocation6 + $0xc0] sm:$0xff]
    %v100 = vld [vmem:[#allocation6 + $0xc8] sm:$0xff]
    %v101 = vld [vmem:[#allocation6 + $0xd0] sm:$0xff]
    %v102 = vld [vmem:[#allocation6 + $0xd8] sm:$0xff]
    %v103 = vld [vmem:[#allocation6 + $0xe0] sm:$0xff]
    %v104 = vld [vmem:[#allocation6 + $0xe8] sm:$0xff]
    %v105 = vld [vmem:[#allocation6 + $0xf0] sm:$0xff]
    %v106 = vld [vmem:[#allocation6 + $0xf8] sm:$0xff]
    %v107 = vld [vmem:[#allocation6 + $0x100] sm:$0xff]
    %v108 = vld [vmem:[#allocation6 + $0x108] sm:$0xff]
    %v109 = vld [vmem:[#allocation6 + $0x110] sm:$0xff]
    %v110 = vld [vmem:[#allocation6 + $0x118] sm:$0xff]
    %v111 = vld [vmem:[#allocation6 + $0x120] sm:$0xff]
    %v112 = vld [vmem:[#allocation6 + $0x128] sm:$0xff]
    %v113 = vld [vmem:[#allocation6 + $0x130] sm:$0xff]
    %v114 = vld [vmem:[#allocation6 + $0x138] sm:$0xff]
    %v115 = vld [vmem:[#allocation6 + $0x140] sm:$0xff]
    %v116 = vld [vmem:[#allocation6 + $0x148] sm:$0xff]
    %v117 = vld [vmem:[#allocation6 + $0x150] sm:$0xff]
    %v118 = vld [vmem:[#allocation6 + $0x158] sm:$0xff]
    %v119 = vld [vmem:[#allocation6 + $0x160] sm:$0xff]
    %v120 = vld [vmem:[#allocation6 + $0x168] sm:$0xff]
    %v121 = vld [vmem:[#allocation6 + $0x170] sm:$0xff]
    %v122 = vld [vmem:[#allocation6 + $0x178] sm:$0xff]
    %v123 = vld [vmem:[#allocation6 + $0x180] sm:$0xff]
    %v124 = vld [vmem:[#allocation6 + $0x188] sm:$0xff]
    %v125 = vld [vmem:[#allocation6 + $0x190] sm:$0xff]
    %v126 = vld [vmem:[#allocation6 + $0x198] sm:$0xff]
    %v127 = vld [vmem:[#allocation6 + $0x1a0] sm:$0xff]
    %v128 = vld [vmem:[#allocation6 + $0x1a8] sm:$0xff]
    %v129 = vld [vmem:[#allocation6 + $0x1b0] sm:$0xff]
    %v130 = vld [vmem:[#allocation6 + $0x1b8] sm:$0xff]
    %v131 = vld [vmem:[#allocation6 + $0x1c0] sm:$0xff]
    %v132 = vld [vmem:[#allocation6 + $0x1c8] sm:$0xff]
    %v133 = vld [vmem:[#allocation6 + $0x1d0] sm:$0xff]
    %v134 = vld [vmem:[#allocation6 + $0x1d8] sm:$0xff]
    %v135 = vld [vmem:[#allocation6 + $0x1e0] sm:$0xff]
    %v136 = vld [vmem:[#allocation6 + $0x1e8] sm:$0xff]
    %v137 = vld [vmem:[#allocation6 + $0x1f0] sm:$0xff]
    %v138 = vld [vmem:[#allocation6 + $0x1f8] sm:$0xff]
    %v139 = vld [vmem:[#allocation6 + $0x200] sm:$0xff]
    %v140 = vld [vmem:[#allocation6 + $0x208] sm:$0xff]
    %v141 = vld [vmem:[#allocation6 + $0x210] sm:$0xff]
    %v142 = vld [vmem:[#allocation6 + $0x218] sm:$0xff]
    %v143 = vld [vmem:[#allocation6 + $0x220] sm:$0xff]
    %v144 = vld [vmem:[#allocation6 + $0x228] sm:$0xff]
    %v145 = vld [vmem:[#allocation6 + $0x230] sm:$0xff]
    %v146 = vld [vmem:[#allocation6 + $0x238] sm:$0xff]
    %v147 = vld [vmem:[#allocation6 + $0x240] sm:$0xff]
    %v148 = vld [vmem:[#allocation6 + $0x248] sm:$0xff]
    %v149 = vld [vmem:[#allocation6 + $0x250] sm:$0xff]
    %v150 = vld [vmem:[#allocation6 + $0x258] sm:$0xff]
    %v151 = vld [vmem:[#allocation6 + $0x260] sm:$0xff]
    %v152 = vld [vmem:[#allocation6 + $0x268] sm:$0xff]
    %v153 = vld [vmem:[#allocation6 + $0x270] sm:$0xff]
    %v154 = vld [vmem:[#allocation6 + $0x278] sm:$0xff]
    %v155 = vld [vmem:[#allocation6 + $0x280] sm:$0xff]
    %v156 = vld [vmem:[#allocation6 + $0x288] sm:$0xff]
    %v157 = vld [vmem:[#allocation6 + $0x290] sm:$0xff]
    %v158 = vld [vmem:[#allocation6 + $0x298] sm:$0xff]
    %v159 = vld [vmem:[#allocation6 + $0x2a0] sm:$0xff]
    %v160 = vld [vmem:[#allocation6 + $0x2a8] sm:$0xff]
    %v161 = vld [vmem:[#allocation6 + $0x2b0] sm:$0xff]
    %v162 = vld [vmem:[#allocation6 + $0x2b8] sm:$0xff]
    %v163 = vld [vmem:[#allocation6 + $0x2c0] sm:$0xff]
    %v164 = vld [vmem:[#allocation6 + $0x2c8] sm:$0xff]
    %v165 = vld [vmem:[#allocation6 + $0x2d0] sm:$0xff]
    %v166 = vld [vmem:[#allocation6 + $0x2d8] sm:$0xff]
    %v167 = vld [vmem:[#allocation6 + $0x2e0] sm:$0xff]
    %v168 = vld [vmem:[#allocation6 + $0x2e8] sm:$0xff]
    %v169 = vld [vmem:[#allocation6 + $0x2f0] sm:$0xff]
    %v170 = vld [vmem:[#allocation6 + $0x2f8] sm:$0xff]
    %171 = vmatprep.subr.mxu0 %v166
    %172 = vmatpush1.msra.mxu0 %v165
    %173 = vmatprep.subr.mxu0 %v160
    %174 = vmatpush1.msra.mxu0 %v159
    %175 = vmatprep.subr.mxu0 %v154
    %176 = vmatpush1.msra.mxu0 %v153
    %177 = vmatprep.subr.mxu0 %v148
    %178 = vmatpush1.msra.mxu0 %v147
    %179 = vmatprep.subr.mxu0 %v142
    %180 = vmatpush1.msra.mxu0 %v141
    %181 = vmatprep.subr.mxu0 %v136
    %182 = vmatpush1.msra.mxu0 %v135
    %183 = vmatprep.subr.mxu0 %v130
    %184 = vmatpush1.msra.mxu0 %v129
    %185 = vmatprep.subr.mxu0 %v124
    %186 = vmatpush1.msra.mxu0 %v123
    %187 = vmatprep.subr.mxu0 %v118
    %188 = vmatpush1.msra.mxu0 %v117
    %189 = vmatprep.subr.mxu0 %v112
    %190 = vmatpush1.msra.mxu0 %v111
    %191 = vmatprep.subr.mxu0 %v106
    %192 = vmatpush1.msra.mxu0 %v105
    %193 = vmatprep.subr.mxu0 %v100
    %194 = vmatpush1.msra.mxu0 %v99
    %195 = vmatprep.subr.mxu0 %v94
    %196 = vmatpush1.msra.mxu0 %v93
    %197 = vmatprep.subr.mxu0 %v88
    %198 = vmatpush1.msra.mxu0 %v87
    %199 = vmatprep.subr.mxu0 %v82
    %200 = vmatpush1.msra.mxu0 %v81
    %201 = vmatprep.subr.mxu0 %v76
    %202 = vmatpush1.msra.mxu0 %v75
    %203 = vmatprep.subr.mxu0 0.0
    %204 = vmatpush2.msra.mxu0 0.0
    %205 = vmatprep.subr.mxu0 0.0
    %206 = vmatpush2.msra.mxu0 0.0
    %207 = vmatprep.subr.mxu0 0.0
    %208 = vmatpush2.msra.mxu0 0.0
    %209 = vmatprep.subr.mxu0 0.0
    %210 = vmatpush2.msra.mxu0 0.0
    %211 = vmatprep.subr.mxu0 0.0
    %212 = vmatpush2.msra.mxu0 0.0
    %213 = vmatprep.subr.mxu0 0.0
    %214 = vmatpush2.msra.mxu0 0.0
    %215 = vmatprep.subr.mxu0 0.0
    %216 = vmatpush2.msra.mxu0 0.0
    %217 = vmatprep.subr.mxu0 0.0
    %218 = vmatpush2.msra.mxu0 0.0
    %219 = vmatprep.subr.mxu0 0.0
    %220 = vmatpush2.msra.mxu0 0.0
    %221 = vmatprep.subr.mxu0 0.0
    %222 = vmatpush2.msra.mxu0 0.0
    %223 = vmatprep.subr.mxu0 0.0
    %224 = vmatpush2.msra.mxu0 0.0
    %225 = vmatprep.subr.mxu0 0.0
    %226 = vmatpush2.msra.mxu0 0.0
    %227 = vmatprep.subr.mxu0 0.0
    %228 = vmatpush2.msra.mxu0 0.0
    %229 = vmatprep.subr.mxu0 0.0
    %230 = vmatpush2.msra.mxu0 0.0
    %231 = vmatprep.subr.mxu0 0.0
    %232 = vmatpush2.msra.mxu0 0.0
    %233 = vmatprep.subr.mxu0 0.0
    %234 = vmatpush2.msra.mxu0 0.0
    %235 = vmatprep.mubr.f32.mxu0 0.0
    %236 = vmatmul.mubr.f32.gmra.mxu0 %v73
    %v237 = vpop.f32.mrf.mxu0
    %v238 = vadd.f32 0.0, %v237
    %v239 = vpop.f32.mrf.mxu0
    %v240 = vadd.f32 0.0, %v239
    %241 = vmatprep.mubr.f32.mxu0 0.0
    %242 = vmatmul.mubr.f32.gmra.mxu0 %v74
    %v243 = vpop.f32.mrf.mxu0
    %v244 = vadd.f32 0.0, %v243
    %v245 = vpop.f32.mrf.mxu0
    %v246 = vadd.f32 0.0, %v245
    %247 = vdwg.mxu0
    %248 = vmatprep.subr.mxu0 %v168
    %249 = vmatpush1.msra.mxu0 %v167
    %250 = vmatprep.subr.mxu0 %v162
    %251 = vmatpush1.msra.mxu0 %v161
    %252 = vmatprep.subr.mxu0 %v156
    %253 = vmatpush1.msra.mxu0 %v155
    %254 = vmatprep.subr.mxu0 %v150
    %255 = vmatpush1.msra.mxu0 %v149
    %256 = vmatprep.subr.mxu0 %v144
    %257 = vmatpush1.msra.mxu0 %v143
    %258 = vmatprep.subr.mxu0 %v138
    %259 = vmatpush1.msra.mxu0 %v137
    %260 = vmatprep.subr.mxu0 %v132
    %261 = vmatpush1.msra.mxu0 %v131
    %262 = vmatprep.subr.mxu0 %v126
    %263 = vmatpush1.msra.mxu0 %v125
    %264 = vmatprep.subr.mxu0 %v120
    %265 = vmatpush1.msra.mxu0 %v119
    %266 = vmatprep.subr.mxu0 %v114
    %267 = vmatpush1.msra.mxu0 %v113
    %268 = vmatprep.subr.mxu0 %v108
    %269 = vmatpush1.msra.mxu0 %v107
    %270 = vmatprep.subr.mxu0 %v102
    %271 = vmatpush1.msra.mxu0 %v101
    %272 = vmatprep.subr.mxu0 %v96
    %273 = vmatpush1.msra.mxu0 %v95
    %274 = vmatprep.subr.mxu0 %v90
    %275 = vmatpush1.msra.mxu0 %v89
    %276 = vmatprep.subr.mxu0 %v84
    %277 = vmatpush1.msra.mxu0 %v83
    %278 = vmatprep.subr.mxu0 %v78
    %279 = vmatpush1.msra.mxu0 %v77
    %280 = vmatprep.subr.mxu0 0.0
    %281 = vmatpush2.msra.mxu0 0.0
    %282 = vmatprep.subr.mxu0 0.0
    %283 = vmatpush2.msra.mxu0 0.0
    %284 = vmatprep.subr.mxu0 0.0
    %285 = vmatpush2.msra.mxu0 0.0
    %286 = vmatprep.subr.mxu0 0.0
    %287 = vmatpush2.msra.mxu0 0.0
    %288 = vmatprep.subr.mxu0 0.0
    %289 = vmatpush2.msra.mxu0 0.0
    %290 = vmatprep.subr.mxu0 0.0
    %291 = vmatpush2.msra.mxu0 0.0
    %292 = vmatprep.subr.mxu0 0.0
    %293 = vmatpush2.msra.mxu0 0.0
    %294 = vmatprep.subr.mxu0 0.0
    %295 = vmatpush2.msra.mxu0 0.0
    %296 = vmatprep.subr.mxu0 0.0
    %297 = vmatpush2.msra.mxu0 0.0
    %298 = vmatprep.subr.mxu0 0.0
    %299 = vmatpush2.msra.mxu0 0.0
    %300 = vmatprep.subr.mxu0 0.0
    %301 = vmatpush2.msra.mxu0 0.0
    %302 = vmatprep.subr.mxu0 0.0
    %303 = vmatpush2.msra.mxu0 0.0
    %304 = vmatprep.subr.mxu0 0.0
    %305 = vmatpush2.msra.mxu0 0.0
    %306 = vmatprep.subr.mxu0 0.0
    %307 = vmatpush2.msra.mxu0 0.0
    %308 = vmatprep.subr.mxu0 0.0
    %309 = vmatpush2.msra.mxu0 0.0
    %310 = vmatprep.subr.mxu0 0.0
    %311 = vmatpush2.msra.mxu0 0.0
    %312 = vmatprep.mubr.f32.mxu0 0.0
    %313 = vmatmul.mubr.f32.gmra.mxu0 %v73
    %v314 = vpop.f32.mrf.mxu0
    %v315 = vadd.f32 0.0, %v314
    %v316 = vpop.f32.mrf.mxu0
    %v317 = vadd.f32 0.0, %v316
    %318 = vmatprep.mubr.f32.mxu0 0.0
    %319 = vmatmul.mubr.f32.gmra.mxu0 %v74
    %v320 = vpop.f32.mrf.mxu0
    %v321 = vadd.f32 0.0, %v320
    %v322 = vpop.f32.mrf.mxu0
    %v323 = vadd.f32 0.0, %v322
    %324 = vdwg.mxu0
    %325 = vmatprep.subr.mxu0 %v170
    %326 = vmatpush1.msra.mxu0 %v169
    %327 = vmatprep.subr.mxu0 %v164
    %328 = vmatpush1.msra.mxu0 %v163
    %329 = vmatprep.subr.mxu0 %v158
    %330 = vmatpush1.msra.mxu0 %v157
    %331 = vmatprep.subr.mxu0 %v152
    %332 = vmatpush1.msra.mxu0 %v151
    %333 = vmatprep.subr.mxu0 %v146
    %334 = vmatpush1.msra.mxu0 %v145
    %335 = vmatprep.subr.mxu0 %v140
    %336 = vmatpush1.msra.mxu0 %v139
    %337 = vmatprep.subr.mxu0 %v134
    %338 = vmatpush1.msra.mxu0 %v133
    %339 = vmatprep.subr.mxu0 %v128
    %340 = vmatpush1.msra.mxu0 %v127
    %341 = vmatprep.subr.mxu0 %v122
    %342 = vmatpush1.msra.mxu0 %v121
    %343 = vmatprep.subr.mxu0 %v116
    %344 = vmatpush1.msra.mxu0 %v115
    %345 = vmatprep.subr.mxu0 %v110
    %346 = vmatpush1.msra.mxu0 %v109
    %347 = vmatprep.subr.mxu0 %v104
    %348 = vmatpush1.msra.mxu0 %v103
    %349 = vmatprep.subr.mxu0 %v98
    %350 = vmatpush1.msra.mxu0 %v97
    %351 = vmatprep.subr.mxu0 %v92
    %352 = vmatpush1.msra.mxu0 %v91
    %353 = vmatprep.subr.mxu0 %v86
    %354 = vmatpush1.msra.mxu0 %v85
    %355 = vmatprep.subr.mxu0 %v80
    %356 = vmatpush1.msra.mxu0 %v79
    %357 = vmatprep.subr.mxu0 0.0
    %358 = vmatpush2.msra.mxu0 0.0
    %359 = vmatprep.subr.mxu0 0.0
    %360 = vmatpush2.msra.mxu0 0.0
    %361 = vmatprep.subr.mxu0 0.0
    %362 = vmatpush2.msra.mxu0 0.0
    %363 = vmatprep.subr.mxu0 0.0
    %364 = vmatpush2.msra.mxu0 0.0
    %365 = vmatprep.subr.mxu0 0.0
    %366 = vmatpush2.msra.mxu0 0.0
    %367 = vmatprep.subr.mxu0 0.0
    %368 = vmatpush2.msra.mxu0 0.0
    %369 = vmatprep.subr.mxu0 0.0
    %370 = vmatpush2.msra.mxu0 0.0
    %371 = vmatprep.subr.mxu0 0.0
    %372 = vmatpush2.msra.mxu0 0.0
    %373 = vmatprep.subr.mxu0 0.0
    %374 = vmatpush2.msra.mxu0 0.0
    %375 = vmatprep.subr.mxu0 0.0
    %376 = vmatpush2.msra.mxu0 0.0
    %377 = vmatprep.subr.mxu0 0.0
    %378 = vmatpush2.msra.mxu0 0.0
    %379 = vmatprep.subr.mxu0 0.0
    %380 = vmatpush2.msra.mxu0 0.0
    %381 = vmatprep.subr.mxu0 0.0
    %382 = vmatpush2.msra.mxu0 0.0
    %383 = vmatprep.subr.mxu0 0.0
    %384 = vmatpush2.msra.mxu0 0.0
    %385 = vmatprep.subr.mxu0 0.0
    %386 = vmatpush2.msra.mxu0 0.0
    %387 = vmatprep.subr.mxu0 0.0
    %388 = vmatpush2.msra.mxu0 0.0
    %389 = vmatprep.mubr.f32.mxu0 0.0
    %390 = vmatmul.mubr.f32.gmra.mxu0 %v73
    %v391 = vpop.f32.mrf.mxu0
    %v392 = vadd.f32 0.0, %v391
    %v393 = vpop.f32.mrf.mxu0
    %v394 = vadd.f32 0.0, %v393
    %395 = vmatprep.mubr.f32.mxu0 0.0
    %396 = vmatmul.mubr.f32.gmra.mxu0 %v74
    %v397 = vpop.f32.mrf.mxu0
    %v398 = vadd.f32 0.0, %v397
    %v399 = vpop.f32.mrf.mxu0
    %v400 = vadd.f32 0.0, %v399
    %401 = vdwg.mxu0
    %v402 = vmul.f32 %v238, %v238
    %v403 = vmul.f32 %v240, %v240
    %v404 = vmul.f32 %v315, %v315
    %v405 = vmul.f32 %v244, %v244
    %v406 = vmul.f32 %v246, %v246
    %v407 = vmul.f32 %v321, %v321
    %v408 = vmul.f32 %v317, %v317
    %v409 = vmul.f32 %v392, %v392
    %v410 = vmul.f32 %v394, %v394
    %v411 = vmul.f32 %v323, %v323
    %v412 = vmul.f32 %v398, %v398
    %v413 = vmul.f32 %v400, %v400
    %v414 = vadd.f32 %v402, %v408
    %v415 = vadd.f32 %v403, %v409
    %v416 = vadd.f32 %v404, %v410
    %v417 = vadd.f32 %v405, %v411
    %v418 = vadd.f32 %v406, %v412
    %v419 = vadd.f32 %v407, %v413
    %v420 = vld [vmem:[%s2] sm:$0xff]
    %v421 = vlaneseq
    %v422 = vand.u32 %v421, 127
    %v423 = vadd.s32 %v422, 128
    %v424 = vadd.s32 %v422, 256
    %v425 = vcvt.s32.f32 %v422
    %v426 = vcvt.s32.f32 %v423
    %v427 = vcvt.s32.f32 %v424
    %429 = vset.pattern.permute.xlu0 0
    %430 = vperm.xlu0 %429, %v420
    %v431 = vpop.permute.xlu0 %430
    %v433 = vmul.f32 %v425, %v431
    %v434 = vmul.f32 %v426, %v431
    %v435 = vmul.f32 %v427, %v431
    %v436 = vmul.f32 %v433, 0.0026041667
    %v437 = vmul.f32 %v434, 0.0026041667
    %v438 = vmul.f32 %v435, 0.0026041667
    %vm439 = vcmp.gt.f32.partialorder %v436, 3.5
    %vm440 = vcmp.gt.f32.partialorder %v437, 3.5
    %vm441 = vcmp.gt.f32.partialorder %v438, 3.5
    %vm442 = vcmp.lt.f32.partialorder %v436, 0.7
    %vm443 = vcmp.lt.f32.partialorder %v437, 0.7
    %vm444 = vcmp.lt.f32.partialorder %v438, 0.7
    %vm445 = vmor %vm439, %vm442
    %vm446 = vmor %vm440, %vm443
    %vm447 = vmor %vm441, %vm444
    %v448 = vsel %vm445, 0.0, %v414
    %v449 = vsel %vm446, 0.0, %v415
    %v450 = vsel %vm447, 0.0, %v416
    %v451 = vsel %vm445, 0.0, %v417
    %v452 = vsel %vm446, 0.0, %v418
    %v453 = vsel %vm447, 0.0, %v419
    %v454 = vmax.f32 %v451, %v452
    %v455 = vmax.f32 %v454, %v453
    %456 = vmax.xlane.f32.xlu0 %v455
    %v457 = vpop.xlane.xlu0 %456
    %vm458 = vcmp.eq.f32.partialorder %v451, %v457
    %vm459 = vcmp.eq.f32.partialorder %v452, %v457
    %vm460 = vcmp.eq.f32.partialorder %v453, %v457
    %v461 = vsel %vm458, %v436, 1e+30
    %v462 = vsel %vm459, %v437, 1e+30
    %v463 = vsel %vm460, %v438, 1e+30
    %v464 = vmin.f32 %v461, %v462
    %v465 = vmin.f32 %v464, %v463
    %466 = vmin.xlane.f32.xlu0 %v465
    %v467 = vpop.xlane.xlu0 %466
    %v468 = vadd.f32 %v467, 0.2
    %vm469 = vcmp.lt.f32.partialorder %v436, %v468
    %vm470 = vcmp.lt.f32.partialorder %v437, %v468
    %vm471 = vcmp.lt.f32.partialorder %v438, %v468
    %v472 = vsub.f32 %v467, 0.2
    %vm473 = vcmp.lt.f32.partialorder %v472, %v436
    %vm474 = vcmp.lt.f32.partialorder %v472, %v437
    %vm475 = vcmp.lt.f32.partialorder %v472, %v438
    %vm476 = vmand %vm469, %vm473
    %vm477 = vmand %vm470, %vm474
    %vm478 = vmand %vm471, %vm475
    %v479 = vmul.f32 %v467, 2.0
    %v480 = vadd.f32 %v479, 0.2
    %vm481 = vcmp.lt.f32.partialorder %v436, %v480
    %vm482 = vcmp.lt.f32.partialorder %v437, %v480
    %vm483 = vcmp.lt.f32.partialorder %v438, %v480
    %v484 = vsub.f32 %v479, 0.2
    %vm485 = vcmp.lt.f32.partialorder %v484, %v436
    %vm486 = vcmp.lt.f32.partialorder %v484, %v437
    %vm487 = vcmp.lt.f32.partialorder %v484, %v438
    %vm488 = vmand %vm481, %vm485
    %vm489 = vmand %vm482, %vm486
    %vm490 = vmand %vm483, %vm487
    %vm491 = vmor %vm476, %vm488
    %vm492 = vmor %vm477, %vm489
    %vm493 = vmor %vm478, %vm490
    %v494 = vsel %vm491, %v448, 0.0
    %v495 = vsel %vm492, %v449, 0.0
    %v496 = vsel %vm493, %v450, 0.0
    %v497 = vadd.f32 %v494, %v495
    %v498 = vadd.f32 %v497, %v496
    %499 = vadd.xlane.f32.xlu0 %v498
    %v500 = vpop.xlane.xlu0 %499
    %v501 = vsel %vm491, 0.0, %v448
    %v502 = vsel %vm492, 0.0, %v449
    %v503 = vsel %vm493, 0.0, %v450
    %v504 = vadd.f32 %v501, %v502
    %v505 = vadd.f32 %v504, %v503
    %506 = vadd.xlane.f32.xlu0 %v505
    %v507 = vpop.xlane.xlu0 %506
    %v508 = vrcp.pop %v507
    %v509 = vmul.f32 %v500, %v508
    %v510 = vlog2.pop %v509
    %v511 = vmul.f32 %v510, 0.6931472
    %v512 = vmul.f32 %v511, 0.4342945
    %v513 = vmul.f32 %v512, 10.0
    %v514 = vmul.f32 %v513, 0.09174312
    %v515 = vmul.f32 %v514, 0.5
    %v516 = vadd.f32 %v70, %v515
    %v517 = vsub.f32 1.0, %v516
    %518 = vst [vmem:[#allocation8] sm:$0xff] %v517
    // Predicated region
    $region26: #{tpu_custom_call.1} parent=1 // pred_check
      _
    $region27: #{tpu_custom_call.1} parent=1 // pred_check_branch
      %520 = sbr.rel (0) target = $region29
    $region28: #{tpu_custom_call.1} parent=1 // pred_region
      %s522 = ssub.s32 128, 128
      %523 = vsyncadd [#allocation5], %s522
      %s525 = sshll.u32 [#allocation8], 4
      %s526 = int_to_ptr.vmem [resolvable:$true] %s525
      %528 = dma.vmem_to_hbm [thread:$0]  %s526, 128, %s4, [#allocation5]
    $region29: #{tpu_custom_call.1} parent=1 // pred_fallthru
      _
    // Predicated region
    $region30: #{tpu_custom_call.1} parent=1 // pred_check
      _
    $region31: #{tpu_custom_call.1} parent=1 // pred_check_branch
      %530 = sbr.rel (0) target = $region33
    $region32: #{tpu_custom_call.1} parent=1 // pred_region
      %531 = dma.done [#allocation5], 128
    $region33: #{tpu_custom_call.1} parent=1 // pred_fallthru
      _
    %532 = vsyncpa [#allocation4], 1
    %533 = vsyncpa [#allocation7], 1
    %534 = vsyncpa [#allocation5], 1

</llo_original>
